<compile_context>
chip_gen: v7x
topology: tpu7x:2x2x1
jax: 0.10.0
libtpu: 0.0.40
codegen_flags: <defaults>
</compile_context>

<pallas_src>
import jax
import jax.numpy as jnp
import numpy as np
from jax.experimental import pallas as pl
from jax.experimental.pallas import tpu as pltpu


def _self_attention_kernel(x_ref, w1_ref, b1_ref, w2_ref, b2_ref, o_ref):
    # x_ref:  (TB, S, D) bf16       w1_ref: (D, da) bf16   b1_ref: (1, da) f32
    # w2_ref: (da, r) bf16          b2_ref: (1, r) f32
    # o_ref:  (TB, S, r) f32   or   (TB, S*r) f32  (lane-dense variant)
    TB, S, D = x_ref.shape
    r = w2_ref.shape[1]

    # Collapse (TB, S) onto the sublane axis: one big MXU matmul per grid step.
    x = x_ref[...].reshape(TB * S, D)  # bf16, streamed from HBM as bf16

    # First linear (bf16 MXU inputs, f32 accumulate) + tanh in f32.
    h = jnp.tanh(
        jnp.dot(x, w1_ref[...], preferred_element_type=jnp.float32)
        + b1_ref[...]
    )

    # Second linear (da -> r), bf16 inputs, f32 accumulate.
    s = (
        jnp.dot(h.astype(jnp.bfloat16), w2_ref[...],
                preferred_element_type=jnp.float32)
        + b2_ref[...]
    ).reshape(TB, S, r)

    # Softmax over the sequence axis (PyTorch dim=1 -> axis 1 here), all f32.
    m = jnp.max(s, axis=1, keepdims=True)
    e = jnp.exp(s - m)
    denom = jnp.sum(e, axis=1, keepdims=True)
    attn = e * pl.reciprocal(denom, approx=True)

    if len(o_ref.shape) == 2:  # lane-dense (TB, S*r) store
        o_ref[...] = attn.reshape(TB, S * r).astype(o_ref.dtype)
    else:
        o_ref[...] = attn.astype(o_ref.dtype)


def _vmem_limit_bytes():
    """Generation-aware VMEM limit: half the physical per-core capacity."""
    try:
        info = pltpu.get_tpu_info()
        cap = getattr(info, "vmem_capacity_bytes", None)
        if cap:
            # v5e/v6e: 128 MiB -> 64 MiB; v7x: 64 MiB/TC -> 32 MiB.
            return int(cap) // 2
    except Exception:
        pass
    return 32 * 1024 * 1024  # conservative (v7x-safe) fallback


def _pick_batch_tile(B, S, D, da, r, tile_budget_bytes):
    """Largest batch tile that fits the VMEM budget, incl. intermediates."""
    x_block = S * D * 2           # bf16 input block
    out_block = S * r * 4         # f32 output block
    # In-kernel temporaries per batch element: x vregs (bf16), h (f32) +
    # bf16 copy, s/e/exp temporaries (f32).
    intermediates = S * D * 2 + S * da * (4 + 2) + 2 * S * r * 4
    per_batch = 2 * x_block + 2 * out_block + intermediates
    # Fixed cost: weight/bias blocks (assume double-buffered worst case).
    fixed = 2 * (D * da * 2 + da * r * 2 + da * 4 + r * 4)
    max_tb = max(1, (tile_budget_bytes - fixed) // per_batch)

    total_x_bytes = B * S * D * 2
    if total_x_bytes <= 512 * 1024:
        # Tiny problem: one (or as few as possible) grid steps; splitting for
        # megacore cannot pay back the ~0.35 us/step overhead here.
        return min(B, max_tb)
    # Large enough: biggest tile that fits the budget, but keep >= 2 steps so
    # the "parallel" batch axis can span both TCs (v7x megacore).
    return max(1, min(max_tb, pl.cdiv(B, 2)))


def _run_pallas(x_in, w1_bf, b1_2d, w2_bf, b2_2d, *, batch_tile, num_tiles,
                lane_dense, out_dtype, vmem_limit, cost,
                single_buffer_weights):
    Bp, S, D = x_in.shape
    da = w1_bf.shape[1]
    r = w2_bf.shape[1]

    def const_spec(shape):
        idx = lambda i, _n=len(shape): (0,) * _n
        if single_buffer_weights:
            # Constant-index blocks never need a second buffer.
            return pl.BlockSpec(shape, idx, pipeline_mode=pl.Buffered(1))
        return pl.BlockSpec(shape, idx)

    in_specs = [
        pl.BlockSpec((batch_tile, S, D), lambda i: (i, 0, 0)),
        const_spec((D, da)),
        const_spec((1, da)),
        const_spec((da, r)),
        const_spec((1, r)),
    ]
    if lane_dense:
        out_shape = jax.ShapeDtypeStruct((Bp, S * r), out_dtype)
        out_spec = pl.BlockSpec((batch_tile, S * r), lambda i: (i, 0))
    else:
        out_shape = jax.ShapeDtypeStruct((Bp, S, r), out_dtype)
        out_spec = pl.BlockSpec((batch_tile, S, r), lambda i: (i, 0, 0))

    return pl.pallas_call(
        _self_attention_kernel,
        out_shape=out_shape,
        grid_spec=pltpu.PrefetchScalarGridSpec(
            num_scalar_prefetch=0,
            grid=(num_tiles,),
            in_specs=in_specs,
            out_specs=out_spec,
        ),
        compiler_params=pltpu.CompilerParams(
            dimension_semantics=("parallel",),
            vmem_limit_bytes=int(vmem_limit),
        ),
        cost_estimate=cost,
    )(x_in, w1_bf, b1_2d, w2_bf, b2_2d)


def self_attention(x, w1, b1, w2, b2, *, batch_tile=None):
    """x: (B, S, D); w1: (D, da); b1: (da,); w2: (da, r); b2: (r,)."""
    B, S, D = x.shape
    da = w1.shape[1]
    r = w2.shape[1]
    out_dtype = x.dtype

    vmem_limit = _vmem_limit_bytes()
    tile_budget = vmem_limit * 3 // 4  # leave 25% headroom inside the limit

    if batch_tile is None:
        batch_tile = _pick_batch_tile(B, S, D, da, r, tile_budget)
    batch_tile = max(1, min(batch_tile, B))

    # Lane-dense output layout only pays off once S*r reaches a full 128-lane
    # vreg row; at the toy shapes we keep the natural (B, S, r) layout.
    lane_dense = (S * r) >= 128

    num_tiles = pl.cdiv(B, batch_tile)
    if lane_dense and num_tiles > 1 and batch_tile % 8 != 0:
        # 2-D output block: second-to-last dim must be a multiple of 8 (or the
        # full batch extent) to satisfy the (8, 128) tiling rule.
        batch_tile = max(8, (batch_tile // 8) * 8)
        num_tiles = pl.cdiv(B, batch_tile)
    Bp = num_tiles * batch_tile

    # Stream x in bf16 (dominant HBM operand); pad batch to a tile multiple.
    x_bf = x.astype(jnp.bfloat16)
    if Bp != B:
        x_bf = jnp.pad(x_bf, ((0, Bp - B), (0, 0), (0, 0)))

    # Weights in bf16 (native MXU dtype); biases stay f32 (added to f32 acc).
    w1_bf = w1.astype(jnp.bfloat16)
    w2_bf = w2.astype(jnp.bfloat16)
    b1_2d = b1.reshape(1, da).astype(jnp.float32)
    b2_2d = b2.reshape(1, r).astype(jnp.float32)

    out_itemsize = jnp.dtype(out_dtype).itemsize
    cost = pl.CostEstimate(
        flops=2 * B * S * D * da + 2 * B * S * da * r,
        transcendentals=B * S * da + B * S * r,  # tanh + exp
        bytes_accessed=(
            B * S * D * 2                 # bf16 x
            + D * da * 2 + da * r * 2     # bf16 weights
            + da * 4 + r * 4              # f32 biases
            + B * S * r * out_itemsize    # output
        ),
    )

    kwargs = dict(batch_tile=batch_tile, num_tiles=num_tiles,
                  lane_dense=lane_dense, out_dtype=out_dtype,
                  vmem_limit=vmem_limit, cost=cost)
    try:
        out = _run_pallas(x_bf, w1_bf, b1_2d, w2_bf, b2_2d,
                          single_buffer_weights=True, **kwargs)
    except Exception:
        # Older JAX without pipeline_mode / Buffered(1) support.
        out = _run_pallas(x_bf, w1_bf, b1_2d, w2_bf, b2_2d,
                          single_buffer_weights=False, **kwargs)

    if lane_dense:
        out = out.reshape(Bp, S, r)
    if Bp != B:
        out = out[:B]
    return out


def _reference(x, w1, b1, w2, b2):
    h = jnp.tanh(jnp.einsum("bsd,de->bse", x, w1) + b1)
    s = jnp.einsum("bse,er->bsr", h, w2) + b2
    return jax.nn.softmax(s, axis=1)


if __name__ == "__main__":
    # Shapes implied by the module: lstm_dim=16 -> input feature dim 32,
    # da=32, r=4, batch=2, seq=8.
    lstm_dim, da, r = 16, 32, 4
    B, S, D = 2, 8, 2 * lstm_dim

    key = jax.random.PRNGKey(0)
    kx, k1, kb1, k2, kb2 = jax.random.split(key, 5)

    x = jax.random.normal(kx, (B, S, D), dtype=jnp.float32)
    # Parameters stored as (in, out) so the kernel needs no transposes.
    w1 = jax.random.normal(k1, (D, da), dtype=jnp.float32) * 0.1
    b1 = jax.random.normal(kb1, (da,), dtype=jnp.float32) * 0.1
    w2 = jax.random.normal(k2, (da, r), dtype=jnp.float32) * 0.1
    b2 = jax.random.normal(kb2, (r,), dtype=jnp.float32) * 0.1

    out = self_attention(x, w1, b1, w2, b2)
    jax.block_until_ready(out)

    ref = _reference(x, w1, b1, w2, b2)
    # bf16 MXU inputs + approx reciprocal -> loosened tolerance vs f32 reference.
    np.testing.assert_allclose(np.asarray(out), np.asarray(ref),
                               rtol=2e-2, atol=1e-2)

    print("KERNEL_OK")
</pallas_src>

<mosaic_0001>
module attributes {stable_mosaic.version = 11 : i64} {
  func.func @_self_attention_kernel(%arg0: i32, %arg1: memref<2x8x32xbf16, #tpu.memory_space<vmem>>, %arg2: memref<32x32xbf16, #tpu.memory_space<vmem>>, %arg3: memref<1x32xf32, #tpu.memory_space<vmem>>, %arg4: memref<32x4xbf16, #tpu.memory_space<vmem>>, %arg5: memref<1x4xf32, #tpu.memory_space<vmem>>, %arg6: memref<2x8x4xf32, #tpu.memory_space<vmem>>) attributes {dimension_semantics = [#tpu.dimension_semantics<parallel>], iteration_bounds = array<i64: 1>, scalar_prefetch = 0 : i64, scratch_operands = 0 : i64, tpu.core_type = #tpu.core_type<tc>, window_params = [{transform_indices = @transform_0, window_bounds = array<i64: 2, 8, 32>}, {pipeline_mode = #tpu.pipeline_mode<synchronous>, transform_indices = @transform_1, window_bounds = array<i64: 32, 32>}, {pipeline_mode = #tpu.pipeline_mode<synchronous>, transform_indices = @transform_2, window_bounds = array<i64: 1, 32>}, {pipeline_mode = #tpu.pipeline_mode<synchronous>, transform_indices = @transform_3, window_bounds = array<i64: 32, 4>}, {pipeline_mode = #tpu.pipeline_mode<synchronous>, transform_indices = @transform_4, window_bounds = array<i64: 1, 4>}, {transform_indices = @transform_5, window_bounds = array<i64: 2, 8, 4>}]} {
    %c0 = arith.constant 0 : index
    %c0_0 = arith.constant 0 : index
    %c0_1 = arith.constant 0 : index
    %0 = vector.load %arg1[%c0, %c0_0, %c0_1] : memref<2x8x32xbf16, #tpu.memory_space<vmem>>, vector<2x8x32xbf16>
    %1 = vector.shape_cast %0 : vector<2x8x32xbf16> to vector<16x32xbf16>
    %c0_2 = arith.constant 0 : index
    %c0_3 = arith.constant 0 : index
    %2 = vector.load %arg2[%c0_2, %c0_3] : memref<32x32xbf16, #tpu.memory_space<vmem>>, vector<32x32xbf16>
    %cst = arith.constant dense<0.000000e+00> : vector<16x32xf32>
    %3 = tpu.matmul %1, %2, %cst {dimension_numbers = #tpu.dot_dimension_numbers<[1], [0], [0], [1], [0, 0, 1, 1], [], []>} : vector<16x32xbf16>, vector<32x32xbf16>, vector<16x32xf32> -> vector<16x32xf32>
    %c0_4 = arith.constant 0 : index
    %c0_5 = arith.constant 0 : index
    %4 = vector.load %arg3[%c0_4, %c0_5] : memref<1x32xf32, #tpu.memory_space<vmem>>, vector<1x32xf32>
    %5 = vector.broadcast %4 : vector<1x32xf32> to vector<16x32xf32>
    %6 = arith.addf %3, %5 : vector<16x32xf32>
    %7 = math.tanh %6 : vector<16x32xf32>
    %8 = arith.truncf %7 : vector<16x32xf32> to vector<16x32xbf16>
    %c0_6 = arith.constant 0 : index
    %c0_7 = arith.constant 0 : index
    %9 = vector.load %arg4[%c0_6, %c0_7] : memref<32x4xbf16, #tpu.memory_space<vmem>>, vector<32x4xbf16>
    %cst_8 = arith.constant dense<0.000000e+00> : vector<16x4xf32>
    %10 = tpu.matmul %8, %9, %cst_8 {dimension_numbers = #tpu.dot_dimension_numbers<[1], [0], [0], [1], [0, 0, 1, 1], [], []>} : vector<16x32xbf16>, vector<32x4xbf16>, vector<16x4xf32> -> vector<16x4xf32>
    %c0_9 = arith.constant 0 : index
    %c0_10 = arith.constant 0 : index
    %11 = vector.load %arg5[%c0_9, %c0_10] : memref<1x4xf32, #tpu.memory_space<vmem>>, vector<1x4xf32>
    %12 = vector.broadcast %11 : vector<1x4xf32> to vector<16x4xf32>
    %13 = arith.addf %10, %12 : vector<16x4xf32>
    %14 = vector.shape_cast %13 : vector<16x4xf32> to vector<2x8x4xf32>
    %cst_11 = arith.constant dense<0xFF800000> : vector<2x4xf32>
    %15 = vector.multi_reduction <maximumf>, %14, %cst_11 [1] : vector<2x8x4xf32> to vector<2x4xf32>
    %16 = vector.shape_cast %15 : vector<2x4xf32> to vector<2x1x4xf32>
    %17 = vector.broadcast %16 : vector<2x1x4xf32> to vector<2x8x4xf32>
    %18 = arith.subf %14, %17 : vector<2x8x4xf32>
    %19 = math.exp %18 : vector<2x8x4xf32>
    %cst_12 = arith.constant dense<0.000000e+00> : vector<2x4xf32>
    %20 = vector.multi_reduction <add>, %19, %cst_12 [1] : vector<2x8x4xf32> to vector<2x4xf32>
    %21 = vector.shape_cast %20 : vector<2x4xf32> to vector<2x1x4xf32>
    %22 = tpu.reciprocal %21 {approx = true} : vector<2x1x4xf32> -> vector<2x1x4xf32>
    %23 = vector.broadcast %22 : vector<2x1x4xf32> to vector<2x8x4xf32>
    %24 = arith.mulf %19, %23 : vector<2x8x4xf32>
    %c0_13 = arith.constant 0 : index
    %c0_14 = arith.constant 0 : index
    %c0_15 = arith.constant 0 : index
    %25 = vector.load %arg6[%c0_13, %c0_14, %c0_15] : memref<2x8x4xf32, #tpu.memory_space<vmem>>, vector<2x8x4xf32>
    tpu.vector_store %arg6[%c0_13, %c0_14, %c0_15], %24 {strides = array<i32>} : memref<2x8x4xf32, #tpu.memory_space<vmem>>, vector<2x8x4xf32>,
    return
  }
  func.func @transform_0(%arg0: i32) -> (i32, i32, i32) {
    %c0_i32 = arith.constant 0 : i32
    %c0_i32_0 = arith.constant 0 : i32
    %c0_i32_1 = arith.constant 0 : i32
    return %arg0, %c0_i32, %c0_i32_0 : i32, i32, i32
  }
  func.func @transform_1(%arg0: i32) -> (i32, i32) {
    %c0_i32 = arith.constant 0 : i32
    %c0_i32_0 = arith.constant 0 : i32
    %c0_i32_1 = arith.constant 0 : i32
    return %c0_i32, %c0_i32_0 : i32, i32
  }
  func.func @transform_2(%arg0: i32) -> (i32, i32) {
    %c0_i32 = arith.constant 0 : i32
    %c0_i32_0 = arith.constant 0 : i32
    %c0_i32_1 = arith.constant 0 : i32
    return %c0_i32, %c0_i32_0 : i32, i32
  }
  func.func @transform_3(%arg0: i32) -> (i32, i32) {
    %c0_i32 = arith.constant 0 : i32
    %c0_i32_0 = arith.constant 0 : i32
    %c0_i32_1 = arith.constant 0 : i32
    return %c0_i32, %c0_i32_0 : i32, i32
  }
  func.func @transform_4(%arg0: i32) -> (i32, i32) {
    %c0_i32 = arith.constant 0 : i32
    %c0_i32_0 = arith.constant 0 : i32
    %c0_i32_1 = arith.constant 0 : i32
    return %c0_i32, %c0_i32_0 : i32, i32
  }
  func.func @transform_5(%arg0: i32) -> (i32, i32, i32) {
    %c0_i32 = arith.constant 0 : i32
    %c0_i32_0 = arith.constant 0 : i32
    %c0_i32_1 = arith.constant 0 : i32
    return %arg0, %c0_i32, %c0_i32_0 : i32, i32, i32
  }
}

module attributes {stable_mosaic.version = 11 : i64} {
  func.func @_self_attention_kernel(%arg0: i32, %arg1: memref<2x8x32xbf16, #tpu.memory_space<vmem>>, %arg2: memref<32x32xbf16, #tpu.memory_space<vmem>>, %arg3: memref<1x32xf32, #tpu.memory_space<vmem>>, %arg4: memref<32x4xbf16, #tpu.memory_space<vmem>>, %arg5: memref<1x4xf32, #tpu.memory_space<vmem>>, %arg6: memref<2x8x4xf32, #tpu.memory_space<vmem>>) attributes {dimension_semantics = [#tpu.dimension_semantics<parallel>], iteration_bounds = array<i64: 1>, scalar_prefetch = 0 : i64, scratch_operands = 0 : i64, tpu.core_type = #tpu.core_type<tc>, window_params = [{transform_indices = @transform_0, window_bounds = array<i64: 2, 8, 32>}, {pipeline_mode = #tpu.pipeline_mode<synchronous>, transform_indices = @transform_1, window_bounds = array<i64: 32, 32>}, {pipeline_mode = #tpu.pipeline_mode<synchronous>, transform_indices = @transform_2, window_bounds = array<i64: 1, 32>}, {pipeline_mode = #tpu.pipeline_mode<synchronous>, transform_indices = @transform_3, window_bounds = array<i64: 32, 4>}, {pipeline_mode = #tpu.pipeline_mode<synchronous>, transform_indices = @transform_4, window_bounds = array<i64: 1, 4>}, {transform_indices = @transform_5, window_bounds = array<i64: 2, 8, 4>}]} {
    %c0 = arith.constant 0 : index
    %c0_0 = arith.constant 0 : index
    %c0_1 = arith.constant 0 : index
    %0 = vector.load %arg1[%c0, %c0_0, %c0_1] : memref<2x8x32xbf16, #tpu.memory_space<vmem>>, vector<2x8x32xbf16>
    %1 = vector.shape_cast %0 : vector<2x8x32xbf16> to vector<16x32xbf16>
    %c0_2 = arith.constant 0 : index
    %c0_3 = arith.constant 0 : index
    %2 = vector.load %arg2[%c0_2, %c0_3] : memref<32x32xbf16, #tpu.memory_space<vmem>>, vector<32x32xbf16>
    %cst = arith.constant dense<0.000000e+00> : vector<16x32xf32>
    %3 = tpu.matmul %1, %2, %cst {dimension_numbers = #tpu.dot_dimension_numbers<[1], [0], [0], [1], [0, 0, 1, 1], [], []>} : vector<16x32xbf16>, vector<32x32xbf16>, vector<16x32xf32> -> vector<16x32xf32>
    %c0_4 = arith.constant 0 : index
    %c0_5 = arith.constant 0 : index
    %4 = vector.load %arg3[%c0_4, %c0_5] : memref<1x32xf32, #tpu.memory_space<vmem>>, vector<1x32xf32>
    %5 = vector.broadcast %4 : vector<1x32xf32> to vector<16x32xf32>
    %6 = arith.addf %3, %5 : vector<16x32xf32>
    %7 = math.tanh %6 : vector<16x32xf32>
    %8 = arith.truncf %7 : vector<16x32xf32> to vector<16x32xbf16>
    %c0_6 = arith.constant 0 : index
    %c0_7 = arith.constant 0 : index
    %9 = vector.load %arg4[%c0_6, %c0_7] : memref<32x4xbf16, #tpu.memory_space<vmem>>, vector<32x4xbf16>
    %cst_8 = arith.constant dense<0.000000e+00> : vector<16x4xf32>
    %10 = tpu.matmul %8, %9, %cst_8 {dimension_numbers = #tpu.dot_dimension_numbers<[1], [0], [0], [1], [0, 0, 1, 1], [], []>} : vector<16x32xbf16>, vector<32x4xbf16>, vector<16x4xf32> -> vector<16x4xf32>
    %c0_9 = arith.constant 0 : index
    %c0_10 = arith.constant 0 : index
    %11 = vector.load %arg5[%c0_9, %c0_10] : memref<1x4xf32, #tpu.memory_space<vmem>>, vector<1x4xf32>
    %12 = vector.broadcast %11 : vector<1x4xf32> to vector<16x4xf32>
    %13 = arith.addf %10, %12 : vector<16x4xf32>
    %14 = vector.shape_cast %13 : vector<16x4xf32> to vector<2x8x4xf32>
    %cst_11 = arith.constant dense<0xFF800000> : vector<2x4xf32>
    %15 = vector.multi_reduction <maximumf>, %14, %cst_11 [1] : vector<2x8x4xf32> to vector<2x4xf32>
    %16 = vector.shape_cast %15 : vector<2x4xf32> to vector<2x1x4xf32>
    %17 = vector.broadcast %16 : vector<2x1x4xf32> to vector<2x8x4xf32>
    %18 = arith.subf %14, %17 : vector<2x8x4xf32>
    %19 = math.exp %18 : vector<2x8x4xf32>
    %cst_12 = arith.constant dense<0.000000e+00> : vector<2x4xf32>
    %20 = vector.multi_reduction <add>, %19, %cst_12 [1] : vector<2x8x4xf32> to vector<2x4xf32>
    %21 = vector.shape_cast %20 : vector<2x4xf32> to vector<2x1x4xf32>
    %22 = tpu.reciprocal %21 {approx = true} : vector<2x1x4xf32> -> vector<2x1x4xf32>
    %23 = vector.broadcast %22 : vector<2x1x4xf32> to vector<2x8x4xf32>
    %24 = arith.mulf %19, %23 : vector<2x8x4xf32>
    %c0_13 = arith.constant 0 : index
    %c0_14 = arith.constant 0 : index
    %c0_15 = arith.constant 0 : index
    %25 = vector.load %arg6[%c0_13, %c0_14, %c0_15] : memref<2x8x4xf32, #tpu.memory_space<vmem>>, vector<2x8x4xf32>
    tpu.vector_store %arg6[%c0_13, %c0_14, %c0_15], %24 {strides = array<i32>} : memref<2x8x4xf32, #tpu.memory_space<vmem>>, vector<2x8x4xf32>,
    return
  }
  func.func @transform_0(%arg0: i32) -> (i32, i32, i32) {
    %c0_i32 = arith.constant 0 : i32
    %c0_i32_0 = arith.constant 0 : i32
    %c0_i32_1 = arith.constant 0 : i32
    return %arg0, %c0_i32, %c0_i32_0 : i32, i32, i32
  }
  func.func @transform_1(%arg0: i32) -> (i32, i32) {
    %c0_i32 = arith.constant 0 : i32
    %c0_i32_0 = arith.constant 0 : i32
    %c0_i32_1 = arith.constant 0 : i32
    return %c0_i32, %c0_i32_0 : i32, i32
  }
  func.func @transform_2(%arg0: i32) -> (i32, i32) {
    %c0_i32 = arith.constant 0 : i32
    %c0_i32_0 = arith.constant 0 : i32
    %c0_i32_1 = arith.constant 0 : i32
    return %c0_i32, %c0_i32_0 : i32, i32
  }
  func.func @transform_3(%arg0: i32) -> (i32, i32) {
    %c0_i32 = arith.constant 0 : i32
    %c0_i32_0 = arith.constant 0 : i32
    %c0_i32_1 = arith.constant 0 : i32
    return %c0_i32, %c0_i32_0 : i32, i32
  }
  func.func @transform_4(%arg0: i32) -> (i32, i32) {
    %c0_i32 = arith.constant 0 : i32
    %c0_i32_0 = arith.constant 0 : i32
    %c0_i32_1 = arith.constant 0 : i32
    return %c0_i32, %c0_i32_0 : i32, i32
  }
  func.func @transform_5(%arg0: i32) -> (i32, i32, i32) {
    %c0_i32 = arith.constant 0 : i32
    %c0_i32_0 = arith.constant 0 : i32
    %c0_i32_1 = arith.constant 0 : i32
    return %arg0, %c0_i32, %c0_i32_0 : i32, i32, i32
  }
}

</mosaic_0001>

<llo_original>
// kernel: tpu_custom_call.1
$region0: #{tpu_custom_call.1}
  #allocation0 [shape = 'u32[]', space=smem, size = 0x4, offset = 0x4, fixed_abs, tag = 'smem constant byte address 0x4 - core index']
  #allocation1 [shape = 'u32[144,128]{1,0:T(1,128)}', space=vmem, size = 0x12000, scoped, tag = 'internal scratch']
  %s0 = inlined_call_operand.hbm [shape: bf16[2,8,32], index: 0, kind: input, shape index: {}]
  %s1 = inlined_call_operand.vmem [shape: bf16[32,32], index: 1, kind: input, shape index: {}]
  %s2 = inlined_call_operand.vmem [shape: f32[1,32], index: 2, kind: input, shape index: {}]
  %s3 = inlined_call_operand.vmem [shape: bf16[32,4], index: 3, kind: input, shape index: {}]
  %s4 = inlined_call_operand.vmem [shape: f32[1,4], index: 4, kind: input, shape index: {}]
  %s5 = inlined_call_operand.vmem [shape: f32[2,8,4], index: 5, kind: output, shape index: {}]
  %s6 = sld [smem:[#allocation0]]
  $region34: #{tpu_custom_call.1} parent=0
    _
  %s8 = ssub.s32 1, %s6
  %s9 = scalar_select 0, %s8, %s6
  $region1: #{tpu_custom_call.1} parent=0
    #allocation2 [shape = 'u8[4096]{0}', space=vmem, size = 0x1000, scoped, tag = 'input window, operand 0, single buffered']
    #allocation3 [shape = 's32[1]{0}', space=sflag, size = 0x4, scoped, tag = 'scoped memory for tpu_custom_call.1']
    %10 = vsyncpa [#allocation3], 0
    // Predicated region
    $region2: #{tpu_custom_call.1} parent=1 // pred_check
      _
    $region3: #{tpu_custom_call.1} parent=1 // pred_check_branch
      %12 = sbr.rel (0) target = $region5
    $region4: #{tpu_custom_call.1} parent=1 // pred_region
      %s14 = ssub.s32 128, 128
      %15 = vsyncadd [#allocation3], %s14
      %s16 = sshll.u32 [#allocation2], 4
      %s17 = int_to_ptr.vmem [resolvable:$true] %s16
      %22 = dma.hbm_to_vmem [thread:$0]  %s0, 128, %s17, [#allocation3], 64, 64, 4
    $region5: #{tpu_custom_call.1} parent=1 // pred_fallthru
      _
    // Predicated region
    $region6: #{tpu_custom_call.1} parent=1 // pred_check
      _
    $region7: #{tpu_custom_call.1} parent=1 // pred_check_branch
      %24 = sbr.rel (0) target = $region9
    $region8: #{tpu_custom_call.1} parent=1 // pred_region
      _
    $region9: #{tpu_custom_call.1} parent=1 // pred_fallthru
      _
    // Predicated region
    $region10: #{tpu_custom_call.1} parent=1 // pred_check
      _
    $region11: #{tpu_custom_call.1} parent=1 // pred_check_branch
      %26 = sbr.rel (0) target = $region13
    $region12: #{tpu_custom_call.1} parent=1 // pred_region
      _
    $region13: #{tpu_custom_call.1} parent=1 // pred_fallthru
      _
    // Predicated region
    $region14: #{tpu_custom_call.1} parent=1 // pred_check
      _
    $region15: #{tpu_custom_call.1} parent=1 // pred_check_branch
      %28 = sbr.rel (0) target = $region17
    $region16: #{tpu_custom_call.1} parent=1 // pred_region
      _
    $region17: #{tpu_custom_call.1} parent=1 // pred_fallthru
      _
    // Predicated region
    $region18: #{tpu_custom_call.1} parent=1 // pred_check
      _
    $region19: #{tpu_custom_call.1} parent=1 // pred_check_branch
      %30 = sbr.rel (0) target = $region21
    $region20: #{tpu_custom_call.1} parent=1 // pred_region
      _
    $region21: #{tpu_custom_call.1} parent=1 // pred_fallthru
      _
    // Predicated region
    $region22: #{tpu_custom_call.1} parent=1 // pred_check
      _
    $region23: #{tpu_custom_call.1} parent=1 // pred_check_branch
      %32 = sbr.rel (0) target = $region25
    $region24: #{tpu_custom_call.1} parent=1 // pred_region
      %33 = dma.done [#allocation3], 128
    $region25: #{tpu_custom_call.1} parent=1 // pred_fallthru
      _
    %v35 = vld [vmem:[#allocation2] sm:$0xf]
    %v36 = vld [vmem:[#allocation2 + $0x4] sm:$0xf]
    %v37 = vld [vmem:[%s1] sm:$0xf]
    %v38 = vld [vmem:[%s1 + $0x4] sm:$0xf]
    %v39 = vld [vmem:[%s1 + $0x8] sm:$0xf]
    %v40 = vld [vmem:[%s1 + $0xc] sm:$0xf]
    %v41 = vld [vmem:[%s2] sm:$0x1]
    %v43 = vlaneseq
    %v44 = vshrl.u32 %v43, 7
    %v45 = vsub.s32 0, %v44
    %v46 = vrot.slane %v41, %v45
    %v50 = vunpack.c.l.b16 %v35
    %v51 = vunpack.c.l.b16 %v36
    %v52 = vpack.c.b16 %v51, %v50
    %v57 = vunpack.c.l.b16 %v37
    %v58 = vunpack.c.l.b16 %v38
    %v59 = vunpack.c.l.b16 %v39
    %v60 = vunpack.c.l.b16 %v40
    %v61 = vpack.c.b16 %v58, %v57
    %v62 = vpack.c.b16 %v60, %v59
    %vm65 = vcmask 261120
    %v67 = vsel %vm65, %v52, 0
    %69 = vmatprep.subr.bf16.mxu0 0
    %70 = vmatpush1.bf16.msra.mxu0 %v61
    %71 = vmatprep.subr.bf16.mxu0 0
    %72 = vmatpush1.bf16.msra.mxu0 %v62
    %73 = vmatprep.subr.bf16.mxu0 0
    %74 = vmatpush1.bf16.msra.mxu0 0
    %75 = vmatprep.subr.bf16.mxu0 0
    %76 = vmatpush1.bf16.msra.mxu0 0
    %77 = vmatprep.subr.bf16.mxu0 0
    %78 = vmatpush1.bf16.msra.mxu0 0
    %79 = vmatprep.subr.bf16.mxu0 0
    %80 = vmatpush1.bf16.msra.mxu0 0
    %81 = vmatprep.subr.bf16.mxu0 0
    %82 = vmatpush1.bf16.msra.mxu0 0
    %83 = vmatprep.subr.bf16.mxu0 0
    %84 = vmatpush1.bf16.msra.mxu0 0
    %85 = vmatprep.subr.bf16.mxu0 0
    %86 = vmatpush1.bf16.msra.mxu0 0
    %87 = vmatprep.subr.bf16.mxu0 0
    %88 = vmatpush1.bf16.msra.mxu0 0
    %89 = vmatprep.subr.bf16.mxu0 0
    %90 = vmatpush1.bf16.msra.mxu0 0
    %91 = vmatprep.subr.bf16.mxu0 0
    %92 = vmatpush1.bf16.msra.mxu0 0
    %93 = vmatprep.subr.bf16.mxu0 0
    %94 = vmatpush1.bf16.msra.mxu0 0
    %95 = vmatprep.subr.bf16.mxu0 0
    %96 = vmatpush1.bf16.msra.mxu0 0
    %97 = vmatprep.subr.bf16.mxu0 0
    %98 = vmatpush1.bf16.msra.mxu0 0
    %99 = vmatprep.subr.bf16.mxu0 0
    %100 = vmatpush1.bf16.msra.mxu0 0
    %101 = vmatprep.mubr.bf16.mxu0 0
    %102 = vmatmul.mubr.bf16.gmra.mrb[0].mxu0 %v67
    %v103 = vpop.f32.mrb[0].mxu0
    %v104 = vadd.f32 %v46, %v103
    %v105 = vpop.f32.mrb[0].mxu0
    %v106 = vpop.f32.mrb[0].mxu0
    %v107 = vadd.f32 %v46, %v106
    %v108 = vpop.f32.mrb[0].mxu0
    %109 = vdwg.mxu0
    %v110 = vtanh.pop %v104
    %v111 = vtanh.pop %v107
    %v112 = vpack.c.bf16 %v111, %v110
    %v113 = vld [vmem:[%s3] sm:$0xf]
    %v114 = vld [vmem:[%s3 + $0x4] sm:$0xf]
    %v115 = vld [vmem:[%s3 + $0x8] sm:$0xf]
    %v116 = vld [vmem:[%s3 + $0xc] sm:$0xf]
    %v117 = vld [vmem:[%s4] sm:$0x1]
    %v119 = vlaneseq
    %v120 = vshrl.u32 %v119, 7
    %v121 = vsub.s32 0, %v120
    %v122 = vrot.slane %v117, %v121
    %v128 = vunpack.c.l.b16 %v113
    %v129 = vunpack.c.l.b16 %v114
    %v130 = vunpack.c.l.b16 %v115
    %v131 = vunpack.c.l.b16 %v116
    %v132 = vpack.c.b16 %v129, %v128
    %v133 = vpack.c.b16 %v131, %v130
    %v137 = vsel %vm65, %v112, 0
    %139 = vmatprep.subr.bf16.mxu0 0
    %140 = vmatpush1.bf16.msra.mxu0 %v132
    %141 = vmatprep.subr.bf16.mxu0 0
    %142 = vmatpush1.bf16.msra.mxu0 %v133
    %143 = vmatprep.subr.bf16.mxu0 0
    %144 = vmatpush1.bf16.msra.mxu0 0
    %145 = vmatprep.subr.bf16.mxu0 0
    %146 = vmatpush1.bf16.msra.mxu0 0
    %147 = vmatprep.subr.bf16.mxu0 0
    %148 = vmatpush1.bf16.msra.mxu0 0
    %149 = vmatprep.subr.bf16.mxu0 0
    %150 = vmatpush1.bf16.msra.mxu0 0
    %151 = vmatprep.subr.bf16.mxu0 0
    %152 = vmatpush1.bf16.msra.mxu0 0
    %153 = vmatprep.subr.bf16.mxu0 0
    %154 = vmatpush1.bf16.msra.mxu0 0
    %155 = vmatprep.subr.bf16.mxu0 0
    %156 = vmatpush1.bf16.msra.mxu0 0
    %157 = vmatprep.subr.bf16.mxu0 0
    %158 = vmatpush1.bf16.msra.mxu0 0
    %159 = vmatprep.subr.bf16.mxu0 0
    %160 = vmatpush1.bf16.msra.mxu0 0
    %161 = vmatprep.subr.bf16.mxu0 0
    %162 = vmatpush1.bf16.msra.mxu0 0
    %163 = vmatprep.subr.bf16.mxu0 0
    %164 = vmatpush1.bf16.msra.mxu0 0
    %165 = vmatprep.subr.bf16.mxu0 0
    %166 = vmatpush1.bf16.msra.mxu0 0
    %167 = vmatprep.subr.bf16.mxu0 0
    %168 = vmatpush1.bf16.msra.mxu0 0
    %169 = vmatprep.subr.bf16.mxu0 0
    %170 = vmatpush1.bf16.msra.mxu0 0
    %171 = vmatprep.mubr.bf16.mxu0 0
    %172 = vmatmul.mubr.bf16.gmra.mrb[0].mxu0 %v137
    %v173 = vpop.f32.mrb[0].mxu0
    %v174 = vadd.f32 %v122, %v173
    %v175 = vpop.f32.mrb[0].mxu0
    %v176 = vpop.f32.mrb[0].mxu0
    %v177 = vadd.f32 %v122, %v176
    %v178 = vpop.f32.mrb[0].mxu0
    %179 = vdwg.mxu0
    %vm180 = vcmask 31744
    %v181 = vsel %vm180, %v174, -inf
    %v182 = vrot.slane %v181, 4
    %v183 = vmax.f32 %v181, %v182
    %v184 = vrot.slane %v183, 2
    %v185 = vmax.f32 %v183, %v184
    %v186 = vrot.slane %v185, 1
    %v187 = vmax.f32 %v185, %v186
    %v188 = vsel %vm180, %v177, -inf
    %v189 = vrot.slane %v188, 4
    %v190 = vmax.f32 %v188, %v189
    %v191 = vrot.slane %v190, 2
    %v192 = vmax.f32 %v190, %v191
    %v193 = vrot.slane %v192, 1
    %v194 = vmax.f32 %v192, %v193
    %v195 = vsub.f32 %v174, %v187
    %v196 = vsub.f32 %v177, %v194
    %v197 = vmul.f32 %v195, 1.442695
    %v198 = vpow.pop %v197
    %v199 = vmul.f32 %v196, 1.442695
    %v200 = vpow.pop %v199
    %v201 = vsel %vm180, %v198, 0.0
    %v202 = vrot.slane %v201, 4
    %v203 = vadd.f32 %v201, %v202
    %v204 = vrot.slane %v203, 2
    %v205 = vadd.f32 %v203, %v204
    %v206 = vrot.slane %v205, 1
    %v207 = vadd.f32 %v205, %v206
    %v208 = vsel %vm180, %v200, 0.0
    %v209 = vrot.slane %v208, 4
    %v210 = vadd.f32 %v208, %v209
    %v211 = vrot.slane %v210, 2
    %v212 = vadd.f32 %v210, %v211
    %v213 = vrot.slane %v212, 1
    %v214 = vadd.f32 %v212, %v213
    %v215 = vrcp.pop %v207
    %v216 = vrcp.pop %v214
    %v217 = vmul.f32 %v198, %v215
    %v218 = vmul.f32 %v200, %v216
    %219 = vst.msk [vmem:[%s5] sm:$0xff] %vm180, %v217
    %220 = vst.msk [vmem:[%s5 + $0x8] sm:$0xff] %vm180, %v218
    // Predicated region
    $region26: #{tpu_custom_call.1} parent=1 // pred_check
      _
    $region27: #{tpu_custom_call.1} parent=1 // pred_check_branch
      %222 = sbr.rel (0) target = $region29
    $region28: #{tpu_custom_call.1} parent=1 // pred_region
      _
    $region29: #{tpu_custom_call.1} parent=1 // pred_fallthru
      _
    // Predicated region
    $region30: #{tpu_custom_call.1} parent=1 // pred_check
      _
    $region31: #{tpu_custom_call.1} parent=1 // pred_check_branch
      %224 = sbr.rel (0) target = $region33
    $region32: #{tpu_custom_call.1} parent=1 // pred_region
      _
    $region33: #{tpu_custom_call.1} parent=1 // pred_fallthru
      _
    %225 = vsyncpa [#allocation3], 1

// kernel: tpu_custom_call.1
$region0: #{tpu_custom_call.1}
  #allocation0 [shape = 'u32[]', space=smem, size = 0x4, offset = 0x4, fixed_abs, tag = 'smem constant byte address 0x4 - core index']
  #allocation1 [shape = 'u32[144,128]{1,0:T(1,128)}', space=vmem, size = 0x12000, scoped, tag = 'internal scratch']
  %s0 = inlined_call_operand.hbm [shape: bf16[2,8,32], index: 0, kind: input, shape index: {}]
  %s1 = inlined_call_operand.vmem [shape: bf16[32,32], index: 1, kind: input, shape index: {}]
  %s2 = inlined_call_operand.vmem [shape: f32[1,32], index: 2, kind: input, shape index: {}]
  %s3 = inlined_call_operand.vmem [shape: bf16[32,4], index: 3, kind: input, shape index: {}]
  %s4 = inlined_call_operand.vmem [shape: f32[1,4], index: 4, kind: input, shape index: {}]
  %s5 = inlined_call_operand.vmem [shape: f32[2,8,4], index: 5, kind: output, shape index: {}]
  %s6 = sld [smem:[#allocation0]]
  $region34: #{tpu_custom_call.1} parent=0
    _
  %s8 = ssub.s32 1, %s6
  %s9 = scalar_select 0, %s8, %s6
  $region1: #{tpu_custom_call.1} parent=0
    #allocation2 [shape = 'u8[4096]{0}', space=vmem, size = 0x1000, scoped, tag = 'input window, operand 0, single buffered']
    #allocation3 [shape = 's32[1]{0}', space=sflag, size = 0x4, scoped, tag = 'scoped memory for tpu_custom_call.1']
    %10 = vsyncpa [#allocation3], 0
    // Predicated region
    $region2: #{tpu_custom_call.1} parent=1 // pred_check
      _
    $region3: #{tpu_custom_call.1} parent=1 // pred_check_branch
      %12 = sbr.rel (0) target = $region5
    $region4: #{tpu_custom_call.1} parent=1 // pred_region
      %s14 = ssub.s32 128, 128
      %15 = vsyncadd [#allocation3], %s14
      %s16 = sshll.u32 [#allocation2], 4
      %s17 = int_to_ptr.vmem [resolvable:$true] %s16
      %22 = dma.hbm_to_vmem [thread:$0]  %s0, 128, %s17, [#allocation3], 64, 64, 4
    $region5: #{tpu_custom_call.1} parent=1 // pred_fallthru
      _
    // Predicated region
    $region6: #{tpu_custom_call.1} parent=1 // pred_check
      _
    $region7: #{tpu_custom_call.1} parent=1 // pred_check_branch
      %24 = sbr.rel (0) target = $region9
    $region8: #{tpu_custom_call.1} parent=1 // pred_region
      _
    $region9: #{tpu_custom_call.1} parent=1 // pred_fallthru
      _
    // Predicated region
    $region10: #{tpu_custom_call.1} parent=1 // pred_check
      _
    $region11: #{tpu_custom_call.1} parent=1 // pred_check_branch
      %26 = sbr.rel (0) target = $region13
    $region12: #{tpu_custom_call.1} parent=1 // pred_region
      _
    $region13: #{tpu_custom_call.1} parent=1 // pred_fallthru
      _
    // Predicated region
    $region14: #{tpu_custom_call.1} parent=1 // pred_check
      _
    $region15: #{tpu_custom_call.1} parent=1 // pred_check_branch
      %28 = sbr.rel (0) target = $region17
    $region16: #{tpu_custom_call.1} parent=1 // pred_region
      _
    $region17: #{tpu_custom_call.1} parent=1 // pred_fallthru
      _
    // Predicated region
    $region18: #{tpu_custom_call.1} parent=1 // pred_check
      _
    $region19: #{tpu_custom_call.1} parent=1 // pred_check_branch
      %30 = sbr.rel (0) target = $region21
    $region20: #{tpu_custom_call.1} parent=1 // pred_region
      _
    $region21: #{tpu_custom_call.1} parent=1 // pred_fallthru
      _
    // Predicated region
    $region22: #{tpu_custom_call.1} parent=1 // pred_check
      _
    $region23: #{tpu_custom_call.1} parent=1 // pred_check_branch
      %32 = sbr.rel (0) target = $region25
    $region24: #{tpu_custom_call.1} parent=1 // pred_region
      %33 = dma.done [#allocation3], 128
    $region25: #{tpu_custom_call.1} parent=1 // pred_fallthru
      _
    %v35 = vld [vmem:[#allocation2] sm:$0xf]
    %v36 = vld [vmem:[#allocation2 + $0x4] sm:$0xf]
    %v37 = vld [vmem:[%s1] sm:$0xf]
    %v38 = vld [vmem:[%s1 + $0x4] sm:$0xf]
    %v39 = vld [vmem:[%s1 + $0x8] sm:$0xf]
    %v40 = vld [vmem:[%s1 + $0xc] sm:$0xf]
    %v41 = vld [vmem:[%s2] sm:$0x1]
    %v43 = vlaneseq
    %v44 = vshrl.u32 %v43, 7
    %v45 = vsub.s32 0, %v44
    %v46 = vrot.slane %v41, %v45
    %v50 = vunpack.c.l.b16 %v35
    %v51 = vunpack.c.l.b16 %v36
    %v52 = vpack.c.b16 %v51, %v50
    %v57 = vunpack.c.l.b16 %v37
    %v58 = vunpack.c.l.b16 %v38
    %v59 = vunpack.c.l.b16 %v39
    %v60 = vunpack.c.l.b16 %v40
    %v61 = vpack.c.b16 %v58, %v57
    %v62 = vpack.c.b16 %v60, %v59
    %vm65 = vcmask 261120
    %v67 = vsel %vm65, %v52, 0
    %69 = vmatprep.subr.bf16.mxu0 0
    %70 = vmatpush1.bf16.msra.mxu0 %v61
    %71 = vmatprep.subr.bf16.mxu0 0
    %72 = vmatpush1.bf16.msra.mxu0 %v62
    %73 = vmatprep.subr.bf16.mxu0 0
    %74 = vmatpush1.bf16.msra.mxu0 0
    %75 = vmatprep.subr.bf16.mxu0 0
    %76 = vmatpush1.bf16.msra.mxu0 0
    %77 = vmatprep.subr.bf16.mxu0 0
    %78 = vmatpush1.bf16.msra.mxu0 0
    %79 = vmatprep.subr.bf16.mxu0 0
    %80 = vmatpush1.bf16.msra.mxu0 0
    %81 = vmatprep.subr.bf16.mxu0 0
    %82 = vmatpush1.bf16.msra.mxu0 0
    %83 = vmatprep.subr.bf16.mxu0 0
    %84 = vmatpush1.bf16.msra.mxu0 0
    %85 = vmatprep.subr.bf16.mxu0 0
    %86 = vmatpush1.bf16.msra.mxu0 0
    %87 = vmatprep.subr.bf16.mxu0 0
    %88 = vmatpush1.bf16.msra.mxu0 0
    %89 = vmatprep.subr.bf16.mxu0 0
    %90 = vmatpush1.bf16.msra.mxu0 0
    %91 = vmatprep.subr.bf16.mxu0 0
    %92 = vmatpush1.bf16.msra.mxu0 0
    %93 = vmatprep.subr.bf16.mxu0 0
    %94 = vmatpush1.bf16.msra.mxu0 0
    %95 = vmatprep.subr.bf16.mxu0 0
    %96 = vmatpush1.bf16.msra.mxu0 0
    %97 = vmatprep.subr.bf16.mxu0 0
    %98 = vmatpush1.bf16.msra.mxu0 0
    %99 = vmatprep.subr.bf16.mxu0 0
    %100 = vmatpush1.bf16.msra.mxu0 0
    %101 = vmatprep.mubr.bf16.mxu0 0
    %102 = vmatmul.mubr.bf16.gmra.mrb[0].mxu0 %v67
    %v103 = vpop.f32.mrb[0].mxu0
    %v104 = vadd.f32 %v46, %v103
    %v105 = vpop.f32.mrb[0].mxu0
    %v106 = vpop.f32.mrb[0].mxu0
    %v107 = vadd.f32 %v46, %v106
    %v108 = vpop.f32.mrb[0].mxu0
    %109 = vdwg.mxu0
    %v110 = vtanh.pop %v104
    %v111 = vtanh.pop %v107
    %v112 = vpack.c.bf16 %v111, %v110
    %v113 = vld [vmem:[%s3] sm:$0xf]
    %v114 = vld [vmem:[%s3 + $0x4] sm:$0xf]
    %v115 = vld [vmem:[%s3 + $0x8] sm:$0xf]
    %v116 = vld [vmem:[%s3 + $0xc] sm:$0xf]
    %v117 = vld [vmem:[%s4] sm:$0x1]
    %v119 = vlaneseq
    %v120 = vshrl.u32 %v119, 7
    %v121 = vsub.s32 0, %v120
    %v122 = vrot.slane %v117, %v121
    %v128 = vunpack.c.l.b16 %v113
    %v129 = vunpack.c.l.b16 %v114
    %v130 = vunpack.c.l.b16 %v115
    %v131 = vunpack.c.l.b16 %v116
    %v132 = vpack.c.b16 %v129, %v128
    %v133 = vpack.c.b16 %v131, %v130
    %v137 = vsel %vm65, %v112, 0
    %139 = vmatprep.subr.bf16.mxu0 0
    %140 = vmatpush1.bf16.msra.mxu0 %v132
    %141 = vmatprep.subr.bf16.mxu0 0
    %142 = vmatpush1.bf16.msra.mxu0 %v133
    %143 = vmatprep.subr.bf16.mxu0 0
    %144 = vmatpush1.bf16.msra.mxu0 0
    %145 = vmatprep.subr.bf16.mxu0 0
    %146 = vmatpush1.bf16.msra.mxu0 0
    %147 = vmatprep.subr.bf16.mxu0 0
    %148 = vmatpush1.bf16.msra.mxu0 0
    %149 = vmatprep.subr.bf16.mxu0 0
    %150 = vmatpush1.bf16.msra.mxu0 0
    %151 = vmatprep.subr.bf16.mxu0 0
    %152 = vmatpush1.bf16.msra.mxu0 0
    %153 = vmatprep.subr.bf16.mxu0 0
    %154 = vmatpush1.bf16.msra.mxu0 0
    %155 = vmatprep.subr.bf16.mxu0 0
    %156 = vmatpush1.bf16.msra.mxu0 0
    %157 = vmatprep.subr.bf16.mxu0 0
    %158 = vmatpush1.bf16.msra.mxu0 0
    %159 = vmatprep.subr.bf16.mxu0 0
    %160 = vmatpush1.bf16.msra.mxu0 0
    %161 = vmatprep.subr.bf16.mxu0 0
    %162 = vmatpush1.bf16.msra.mxu0 0
    %163 = vmatprep.subr.bf16.mxu0 0
    %164 = vmatpush1.bf16.msra.mxu0 0
    %165 = vmatprep.subr.bf16.mxu0 0
    %166 = vmatpush1.bf16.msra.mxu0 0
    %167 = vmatprep.subr.bf16.mxu0 0
    %168 = vmatpush1.bf16.msra.mxu0 0
    %169 = vmatprep.subr.bf16.mxu0 0
    %170 = vmatpush1.bf16.msra.mxu0 0
    %171 = vmatprep.mubr.bf16.mxu0 0
    %172 = vmatmul.mubr.bf16.gmra.mrb[0].mxu0 %v137
    %v173 = vpop.f32.mrb[0].mxu0
    %v174 = vadd.f32 %v122, %v173
    %v175 = vpop.f32.mrb[0].mxu0
    %v176 = vpop.f32.mrb[0].mxu0
    %v177 = vadd.f32 %v122, %v176
    %v178 = vpop.f32.mrb[0].mxu0
    %179 = vdwg.mxu0
    %vm180 = vcmask 31744
    %v181 = vsel %vm180, %v174, -inf
    %v182 = vrot.slane %v181, 4
    %v183 = vmax.f32 %v181, %v182
    %v184 = vrot.slane %v183, 2
    %v185 = vmax.f32 %v183, %v184
    %v186 = vrot.slane %v185, 1
    %v187 = vmax.f32 %v185, %v186
    %v188 = vsel %vm180, %v177, -inf
    %v189 = vrot.slane %v188, 4
    %v190 = vmax.f32 %v188, %v189
    %v191 = vrot.slane %v190, 2
    %v192 = vmax.f32 %v190, %v191
    %v193 = vrot.slane %v192, 1
    %v194 = vmax.f32 %v192, %v193
    %v195 = vsub.f32 %v174, %v187
    %v196 = vsub.f32 %v177, %v194
    %v197 = vmul.f32 %v195, 1.442695
    %v198 = vpow.pop %v197
    %v199 = vmul.f32 %v196, 1.442695
    %v200 = vpow.pop %v199
    %v201 = vsel %vm180, %v198, 0.0
    %v202 = vrot.slane %v201, 4
    %v203 = vadd.f32 %v201, %v202
    %v204 = vrot.slane %v203, 2
    %v205 = vadd.f32 %v203, %v204
    %v206 = vrot.slane %v205, 1
    %v207 = vadd.f32 %v205, %v206
    %v208 = vsel %vm180, %v200, 0.0
    %v209 = vrot.slane %v208, 4
    %v210 = vadd.f32 %v208, %v209
    %v211 = vrot.slane %v210, 2
    %v212 = vadd.f32 %v210, %v211
    %v213 = vrot.slane %v212, 1
    %v214 = vadd.f32 %v212, %v213
    %v215 = vrcp.pop %v207
    %v216 = vrcp.pop %v214
    %v217 = vmul.f32 %v198, %v215
    %v218 = vmul.f32 %v200, %v216
    %219 = vst.msk [vmem:[%s5] sm:$0xff] %vm180, %v217
    %220 = vst.msk [vmem:[%s5 + $0x8] sm:$0xff] %vm180, %v218
    // Predicated region
    $region26: #{tpu_custom_call.1} parent=1 // pred_check
      _
    $region27: #{tpu_custom_call.1} parent=1 // pred_check_branch
      %222 = sbr.rel (0) target = $region29
    $region28: #{tpu_custom_call.1} parent=1 // pred_region
      _
    $region29: #{tpu_custom_call.1} parent=1 // pred_fallthru
      _
    // Predicated region
    $region30: #{tpu_custom_call.1} parent=1 // pred_check
      _
    $region31: #{tpu_custom_call.1} parent=1 // pred_check_branch
      %224 = sbr.rel (0) target = $region33
    $region32: #{tpu_custom_call.1} parent=1 // pred_region
      _
    $region33: #{tpu_custom_call.1} parent=1 // pred_fallthru
      _
    %225 = vsyncpa [#allocation3], 1

</llo_original>
